<compile_context>
chip_gen: v5e
topology: v5e:2x2
jax: 0.10.0
libtpu: 0.0.40
codegen_flags: <defaults>
</compile_context>

<pallas_src>
import jax
import jax.numpy as jnp
from jax import lax
from jax.experimental import pallas as pl
from jax.experimental.pallas import tpu as pltpu

_EPS = 1e-5


# --------------------------------------------------------------------------
# Helpers
# --------------------------------------------------------------------------
def _default_vmem_limit():
    """Generation-aware VMEM limit: ~3/4 of physical, capped, with fallback."""
    try:
        cap = int(pltpu.get_tpu_info().vmem_capacity_bytes)
    except Exception:
        cap = 64 * 1024 * 1024
    return max(32 * 1024 * 1024, min((cap * 3) // 4, 100 * 1024 * 1024))


def _pick_tile_s(S, cap):
    """Largest sublane-aligned divisor of S that is <= cap; prefer keeping at
    least 2 sequence tiles so the 'parallel' grid axis can use both v7x TCs."""
    cap = min(cap, S)
    prefer = min(cap, S // 2) if S >= 256 else cap
    for limit in (prefer, cap):
        t = limit - (limit % 8)
        while t >= 8:
            if S % t == 0:
                return t
            t -= 8
    return S  # single full-length tile (block dim == full array dim is legal)


def _fold_attention(G, csum, seq_len, wq, bq, wk, bk, wv, bv, wh, bh, cdt):
    """Sequence-independent feature-space math (f32, tiny):
    scores = Q^T K / sqrt(d_k) expanded through the affine projections,
    softmax, then fold V / head projections into one D x D weight."""
    f32 = jnp.float32
    d_k = wq.shape[1]
    scale = 1.0 / (d_k ** 0.5)
    hp = lambda a, b: jnp.dot(a, b, precision='highest')
    wq_s = (wq * scale).astype(f32)
    bq_s = (bq * scale).astype(f32)
    wk_f, bk_f = wk.astype(f32), bk.astype(f32)
    s_mat = (hp(hp(wq_s.T, G), wk_f)
             + hp(hp(wq_s.T, csum.T), bk_f)
             + hp(bq_s.T, hp(csum, wk_f))
             + float(seq_len) * hp(bq_s.T, bk_f))
    s_mat = s_mat - jnp.max(s_mat, axis=-1, keepdims=True)
    e = jnp.exp(s_mat)
    p_t = (e / jnp.sum(e, axis=-1, keepdims=True)).T          # exact divide
    w_attn = hp(hp(wv.astype(f32), p_t), wh.astype(f32)).astype(cdt)   # (D, D)
    b_attn = hp(hp(bv.astype(f32), p_t), wh.astype(f32)) + bh.astype(f32)
    return w_attn, b_attn


# --------------------------------------------------------------------------
# Pass 1: Gram-matrix + column-sum reduction over sequence tiles
# --------------------------------------------------------------------------
def _gram_kernel(x_ref, g_ref, c_ref):
    @pl.when(pl.program_id(1) == 0)
    def _():
        g_ref[...] = jnp.zeros_like(g_ref)
        c_ref[...] = jnp.zeros_like(c_ref)

    x = x_ref[...]                                        # (tile_s, D), bf16
    g_ref[...] += jnp.einsum('sd,se->de', x, x,
                             preferred_element_type=jnp.float32)
    c_ref[...] += jnp.sum(x.astype(jnp.float32), axis=0, keepdims=True)


# --------------------------------------------------------------------------
# Pass 2: folded attention + residual/LN + FFN + residual/LN per tile
# --------------------------------------------------------------------------
def _apply_kernel(x_ref, wa_ref, ba_ref, g1_ref, be1_ref,
                  w1_ref, bf1_ref, w2_ref, bf2_ref, g2_ref, be2_ref, o_ref):
    xb = x_ref[...]                                       # (tile_s, D), bf16
    cdt = xb.dtype

    # attention (algebraically folded): attn = x @ (Wv P^T Wh) + (bv P^T Wh + bh)
    attn = jnp.dot(xb, wa_ref[...], preferred_element_type=jnp.float32) + ba_ref[...]

    # residual + LayerNorm1 (centered two-pass variance; f32 tile starts here)
    h = x_ref[...].astype(jnp.float32) + attn
    mu = jnp.mean(h, axis=-1, keepdims=True)
    d = h - mu
    h = (d * lax.rsqrt(jnp.mean(d * d, axis=-1, keepdims=True) + _EPS)
         * g1_ref[...] + be1_ref[...])

    # position-wise feed-forward (hidden activation carried in bf16)
    f = jnp.dot(h.astype(cdt), w1_ref[...],
                preferred_element_type=jnp.float32) + bf1_ref[...]
    f = jnp.maximum(f, 0.0).astype(cdt)
    f = jnp.dot(f, w2_ref[...], preferred_element_type=jnp.float32) + bf2_ref[...]

    # residual + LayerNorm2
    h2 = h + f
    mu2 = jnp.mean(h2, axis=-1, keepdims=True)
    d2 = h2 - mu2
    o_ref[...] = (d2 * lax.rsqrt(jnp.mean(d2 * d2, axis=-1, keepdims=True) + _EPS)
                  * g2_ref[...] + be2_ref[...]).astype(o_ref.dtype)


# --------------------------------------------------------------------------
# Wrapper
# --------------------------------------------------------------------------
def encoder_layer(x, params, *, tile_s_cap=512, compute_dtype=jnp.bfloat16,
                  vmem_limit_bytes=None):
    (wq, bq, wk, bk, wv, bv, wh, bh,
     g1, be1, w1, bf1, w2, bf2, g2, be2) = params
    S, D = x.shape
    d_k = wq.shape[1]
    d_v = wv.shape[1]
    d_ff = w1.shape[1]
    assert wk.shape[1] == d_k and wh.shape[0] == d_v and d_k == d_v, \
        "reference 'transposed' attention requires d_k == d_v"

    cdt, f32 = compute_dtype, jnp.float32
    nbytes = lambda a: a.size * a.dtype.itemsize
    if vmem_limit_bytes is None:
        vmem_limit_bytes = _default_vmem_limit()

    tile_s = _pick_tile_s(S, tile_s_cap)
    # TODO(synk): handle S % tile_s != 0 with a masked tail tile if ever needed.
    assert S % tile_s == 0, "sequence length must be divisible by tile_s"
    n_tiles = S // tile_s
    n_par = 2 if (n_tiles >= 2 and n_tiles % 2 == 0) else 1   # v7x: use both TCs
    n_red = n_tiles // n_par

    xb = x.astype(cdt)

    # ---------------- pass 1: Gram + column-sum reduction ----------------
    gram_cost = pl.CostEstimate(
        flops=2 * S * D * D,
        transcendentals=0,
        bytes_accessed=nbytes(xb) + n_par * (D * D + D) * 4,
    )
    g_parts, c_parts = pl.pallas_call(
        _gram_kernel,
        out_shape=(jax.ShapeDtypeStruct((n_par, D, D), f32),
                   jax.ShapeDtypeStruct((n_par, 1, D), f32)),
        grid_spec=pltpu.PrefetchScalarGridSpec(
            num_scalar_prefetch=0,
            grid=(n_par, n_red),
            in_specs=[pl.BlockSpec((tile_s, D),
                                   lambda p, k: (p * n_red + k, 0))],
            out_specs=(pl.BlockSpec((None, D, D), lambda p, k: (p, 0, 0)),
                       pl.BlockSpec((None, 1, D), lambda p, k: (p, 0, 0))),
        ),
        compiler_params=pltpu.CompilerParams(
            dimension_semantics=("parallel", "arbitrary"),
            vmem_limit_bytes=vmem_limit_bytes,
        ),
        cost_estimate=gram_cost,
    )(xb)

    # ------- tiny sequence-independent feature-space math (XLA, f32) -------
    w_attn, b_attn = _fold_attention(
        jnp.sum(g_parts, axis=0), jnp.sum(c_parts, axis=0), S,
        wq, bq, wk, bk, wv, bv, wh, bh, cdt)

    # ---------------- pass 2: apply attention + LN + FFN + LN ----------------
    w1_c, w2_c = w1.astype(cdt), w2.astype(cdt)
    apply_cost = pl.CostEstimate(
        flops=2 * S * (D * D + 2 * D * d_ff),
        transcendentals=2 * S,
        bytes_accessed=nbytes(xb) + nbytes(w_attn) + nbytes(w1_c) + nbytes(w2_c)
        + S * D * x.dtype.itemsize,
    )

    def run_apply(resident):
        return pl.pallas_call(
            _apply_kernel,
            out_shape=jax.ShapeDtypeStruct((S, D), x.dtype),
            grid_spec=pltpu.PrefetchScalarGridSpec(
                num_scalar_prefetch=0,
                grid=(n_tiles,),
                in_specs=[
                    pl.BlockSpec((tile_s, D), lambda i: (i, 0)),  # x tile
                    resident((D, D)), resident((1, D)),      # folded attn W/b
                    resident((1, D)), resident((1, D)),      # LN1 gamma/beta
                    resident((D, d_ff)), resident((1, d_ff)),  # FFN fc1
                    resident((d_ff, D)), resident((1, D)),     # FFN fc2
                    resident((1, D)), resident((1, D)),      # LN2 gamma/beta
                ],
                out_specs=pl.BlockSpec((tile_s, D), lambda i: (i, 0)),
            ),
            compiler_params=pltpu.CompilerParams(
                dimension_semantics=("parallel",),   # shard seq tiles across TCs
                vmem_limit_bytes=vmem_limit_bytes,
            ),
            cost_estimate=apply_cost,
        )(xb, w_attn, b_attn,
          g1.astype(f32), be1.astype(f32),
          w1_c, bf1.astype(f32), w2_c, bf2.astype(f32),
          g2.astype(f32), be2.astype(f32))

    try:
        # Constant-index operands: single-buffer (no pointless double-buffering
        # of resident weights -> halves their VMEM footprint at realistic D/d_ff).
        out = run_apply(
            lambda shape: pl.BlockSpec(shape, lambda i: (0, 0),
                                       pipeline_mode=pl.Buffered(1)))
    except Exception:
        # Fallback for Pallas versions without BlockSpec(pipeline_mode=...).
        out = run_apply(lambda shape: pl.BlockSpec(shape, lambda i: (0, 0)))
    return out


# --------------------------------------------------------------------------
# Parameters + references
# --------------------------------------------------------------------------
def init_params(key, d_model, d_k, d_v, d_ff):
    keys = jax.random.split(key, 6)

    def lin(k, din, dout):
        kw, kb = jax.random.split(k)
        w = jax.random.normal(kw, (din, dout), jnp.float32) * (1.0 / jnp.sqrt(din))
        b = jax.random.normal(kb, (1, dout), jnp.float32) * 0.01
        return w, b

    wq, bq = lin(keys[0], d_model, d_k)
    wk, bk = lin(keys[1], d_model, d_k)
    wv, bv = lin(keys[2], d_model, d_v)
    wh, bh = lin(keys[3], d_v, d_model)
    w1, bf1 = lin(keys[4], d_model, d_ff)
    w2, bf2 = lin(keys[5], d_ff, d_model)
    g1 = jnp.ones((1, d_model), jnp.float32)
    be1 = jnp.zeros((1, d_model), jnp.float32)
    g2 = jnp.ones((1, d_model), jnp.float32)
    be2 = jnp.zeros((1, d_model), jnp.float32)
    return (wq, bq, wk, bk, wv, bv, wh, bh, g1, be1, w1, bf1, w2, bf2, g2, be2)


def reference_f32(x, params):
    """Faithful f32 port of the PyTorch EncoderLayer forward."""
    (wq, bq, wk, bk, wv, bv, wh, bh,
     g1, be1, w1, bf1, w2, bf2, g2, be2) = params
    eps = _EPS
    q = x @ wq + bq
    k = x @ wk + bk
    v = x @ wv + bv
    s = (q.T @ k) / jnp.sqrt(jnp.float32(k.shape[-1]))
    p = jax.nn.softmax(s, axis=-1)
    head = (p @ v.T).T
    h = x + head @ wh + bh
    mu = h.mean(-1, keepdims=True)
    var = ((h - mu) ** 2).mean(-1, keepdims=True)
    h = (h - mu) / jnp.sqrt(var + eps) * g1 + be1
    f = jnp.maximum(h @ w1 + bf1, 0.0)
    f = f @ w2 + bf2
    h2 = h + f
    mu2 = h2.mean(-1, keepdims=True)
    var2 = ((h2 - mu2) ** 2).mean(-1, keepdims=True)
    return (h2 - mu2) / jnp.sqrt(var2 + eps) * g2 + be2


def reference_mixed(x, params, compute_dtype=jnp.bfloat16):
    """Same math / mixed-precision policy as the kernel path (Gram formulation,
    bf16 MXU operands, f32 accumulation and element-wise math)."""
    (wq, bq, wk, bk, wv, bv, wh, bh,
     g1, be1, w1, bf1, w2, bf2, g2, be2) = params
    c, f32, eps = compute_dtype, jnp.float32, _EPS
    S = x.shape[0]
    xb = x.astype(c)

    G = jnp.einsum('sd,se->de', xb, xb, preferred_element_type=f32)
    csum = jnp.sum(xb.astype(f32), axis=0, keepdims=True)
    w_attn, b_attn = _fold_attention(G, csum, S, wq, bq, wk, bk, wv, bv, wh, bh, c)

    attn = jnp.dot(xb, w_attn, preferred_element_type=f32) + b_attn
    h = xb.astype(f32) + attn
    mu = h.mean(-1, keepdims=True)
    d = h - mu
    h = d * lax.rsqrt((d * d).mean(-1, keepdims=True) + eps) * g1 + be1
    f = jnp.dot(h.astype(c), w1.astype(c), preferred_element_type=f32) + bf1
    f = jnp.maximum(f, 0.0).astype(c)
    f = jnp.dot(f, w2.astype(c), preferred_element_type=f32) + bf2
    h2 = h + f
    mu2 = h2.mean(-1, keepdims=True)
    d2 = h2 - mu2
    return d2 * lax.rsqrt((d2 * d2).mean(-1, keepdims=True) + eps) * g2 + be2


if __name__ == "__main__":
    # Small shapes consistent with the module's 2-D forward (seq, d_model).
    # d_model / d_ff are lane-dense (multiples of 128) for unmasked stores;
    # d_k/d_v only appear in the tiny XLA feature-space glue so they can be 64.
    S, D_MODEL, D_K, D_V, D_FF = 512, 128, 64, 64, 256

    root = jax.random.PRNGKey(0)
    kx, kp = jax.random.split(root)
    x = jax.random.normal(kx, (S, D_MODEL), jnp.float32)
    params = init_params(kp, D_MODEL, D_K, D_V, D_FF)

    out = jax.block_until_ready(encoder_layer(x, params))

    ref_m = reference_mixed(x, params)   # same mixed-precision numerics policy
    ref_f = reference_f32(x, params)     # pure-f32 module semantics

    assert out.shape == ref_m.shape == (S, D_MODEL)
    assert bool(jnp.allclose(out, ref_m, rtol=2e-2, atol=2e-2)), \
        "mismatch vs mixed-precision reference"
    assert bool(jnp.allclose(out, ref_f, rtol=1e-1, atol=1e-1)), \
        "mismatch vs f32 reference"

    print("KERNEL_OK")
</pallas_src>

<mosaic_0001>
module attributes {stable_mosaic.version = 11 : i64} {
  func.func @_gram_kernel(%arg0: i32, %arg1: i32, %arg2: memref<256x128xbf16, #tpu.memory_space<vmem>>, %arg3: memref<1x128x128xf32, #tpu.memory_space<vmem>>, %arg4: memref<1x1x128xf32, #tpu.memory_space<vmem>>) attributes {dimension_semantics = [#tpu.dimension_semantics<parallel>, #tpu.dimension_semantics<arbitrary>], iteration_bounds = array<i64: 2, 1>, scalar_prefetch = 0 : i64, scratch_operands = 0 : i64, tpu.core_type = #tpu.core_type<tc>, window_params = [{transform_indices = @transform_0, window_bounds = array<i64: 256, 128>}, {transform_indices = @transform_1, window_bounds = array<i64: 1, 128, 128>}, {transform_indices = @transform_2, window_bounds = array<i64: 1, 1, 128>}]} {
    %c0_i32 = arith.constant 0 : i32
    %0 = arith.cmpi eq, %arg1, %c0_i32 : i32
    %1 = arith.extui %0 : i1 to i32
    %c0_i32_0 = arith.constant 0 : i32
    %2 = arith.cmpi ne, %1, %c0_i32_0 : i32
    scf.if %2 {
      %cst_15 = arith.constant 0.000000e+00 : f32
      %20 = vector.broadcast %cst_15 : f32 to vector<128x128xf32>
      %c0_16 = arith.constant 0 : index
      %c0_17 = arith.constant 0 : index
      %c0_18 = arith.constant 0 : index
      %21 = vector.load %arg3[%c0_16, %c0_17, %c0_18] : memref<1x128x128xf32, #tpu.memory_space<vmem>>, vector<1x128x128xf32>
      %22 = vector.shape_cast %21 : vector<1x128x128xf32> to vector<128x128xf32>
      %23 = vector.shape_cast %20 : vector<128x128xf32> to vector<1x128x128xf32>
      tpu.vector_store %arg3[%c0_16, %c0_17, %c0_18], %23 {strides = array<i32>} : memref<1x128x128xf32, #tpu.memory_space<vmem>>, vector<1x128x128xf32>,
      %cst_19 = arith.constant 0.000000e+00 : f32
      %24 = vector.broadcast %cst_19 : f32 to vector<1x128xf32>
      %c0_20 = arith.constant 0 : index
      %c0_21 = arith.constant 0 : index
      %c0_22 = arith.constant 0 : index
      %25 = vector.load %arg4[%c0_20, %c0_21, %c0_22] : memref<1x1x128xf32, #tpu.memory_space<vmem>>, vector<1x1x128xf32>
      %26 = vector.shape_cast %25 : vector<1x1x128xf32> to vector<1x128xf32>
      %27 = vector.shape_cast %24 : vector<1x128xf32> to vector<1x1x128xf32>
      tpu.vector_store %arg4[%c0_20, %c0_21, %c0_22], %27 {strides = array<i32>} : memref<1x1x128xf32, #tpu.memory_space<vmem>>, vector<1x1x128xf32>,
    } else {
    }
    %c0 = arith.constant 0 : index
    %c0_1 = arith.constant 0 : index
    %3 = vector.load %arg2[%c0, %c0_1] : memref<256x128xbf16, #tpu.memory_space<vmem>>, vector<256x128xbf16>
    %c0_2 = arith.constant 0 : index
    %c0_3 = arith.constant 0 : index
    %c0_4 = arith.constant 0 : index
    %4 = vector.load %arg3[%c0_2, %c0_3, %c0_4] : memref<1x128x128xf32, #tpu.memory_space<vmem>>, vector<1x128x128xf32>
    %5 = vector.shape_cast %4 : vector<1x128x128xf32> to vector<128x128xf32>
    "tpu.trace_start"() <{level = 10 : i32, message = "sd,se->de"}> : () -> ()
    %cst = arith.constant dense<0.000000e+00> : vector<128x128xf32>
    %6 = tpu.matmul %3, %3, %cst {dimension_numbers = #tpu.dot_dimension_numbers<[0], [0], [1], [1], [0, 1, 1, 1], [], []>} : vector<256x128xbf16>, vector<256x128xbf16>, vector<128x128xf32> -> vector<128x128xf32>
    "tpu.trace_stop"() : () -> ()
    %7 = arith.addf %5, %6 : vector<128x128xf32>
    %c0_5 = arith.constant 0 : index
    %c0_6 = arith.constant 0 : index
    %c0_7 = arith.constant 0 : index
    %8 = vector.load %arg3[%c0_5, %c0_6, %c0_7] : memref<1x128x128xf32, #tpu.memory_space<vmem>>, vector<1x128x128xf32>
    %9 = vector.shape_cast %8 : vector<1x128x128xf32> to vector<128x128xf32>
    %10 = vector.shape_cast %7 : vector<128x128xf32> to vector<1x128x128xf32>
    tpu.vector_store %arg3[%c0_5, %c0_6, %c0_7], %10 {strides = array<i32>} : memref<1x128x128xf32, #tpu.memory_space<vmem>>, vector<1x128x128xf32>,
    %c0_8 = arith.constant 0 : index
    %c0_9 = arith.constant 0 : index
    %c0_10 = arith.constant 0 : index
    %11 = vector.load %arg4[%c0_8, %c0_9, %c0_10] : memref<1x1x128xf32, #tpu.memory_space<vmem>>, vector<1x1x128xf32>
    %12 = vector.shape_cast %11 : vector<1x1x128xf32> to vector<1x128xf32>
    %13 = arith.extf %3 : vector<256x128xbf16> to vector<256x128xf32>
    %cst_11 = arith.constant dense<0.000000e+00> : vector<128xf32>
    %14 = vector.multi_reduction <add>, %13, %cst_11 [0] : vector<256x128xf32> to vector<128xf32>
    %15 = vector.shape_cast %14 : vector<128xf32> to vector<1x128xf32>
    %16 = arith.addf %12, %15 : vector<1x128xf32>
    %c0_12 = arith.constant 0 : index
    %c0_13 = arith.constant 0 : index
    %c0_14 = arith.constant 0 : index
    %17 = vector.load %arg4[%c0_12, %c0_13, %c0_14] : memref<1x1x128xf32, #tpu.memory_space<vmem>>, vector<1x1x128xf32>
    %18 = vector.shape_cast %17 : vector<1x1x128xf32> to vector<1x128xf32>
    %19 = vector.shape_cast %16 : vector<1x128xf32> to vector<1x1x128xf32>
    tpu.vector_store %arg4[%c0_12, %c0_13, %c0_14], %19 {strides = array<i32>} : memref<1x1x128xf32, #tpu.memory_space<vmem>>, vector<1x1x128xf32>,
    return
  }
  func.func @transform_0(%arg0: i32, %arg1: i32) -> (i32, i32) {
    %c1_i32 = arith.constant 1 : i32
    %0 = arith.muli %arg0, %c1_i32 : i32
    %1 = arith.addi %0, %arg1 : i32
    %c0_i32 = arith.constant 0 : i32
    %c0_i32_0 = arith.constant 0 : i32
    return %1, %c0_i32 : i32, i32
  }
  func.func @transform_1(%arg0: i32, %arg1: i32) -> (i32, i32, i32) {
    %c0_i32 = arith.constant 0 : i32
    %c0_i32_0 = arith.constant 0 : i32
    %c0_i32_1 = arith.constant 0 : i32
    return %arg0, %c0_i32, %c0_i32_0 : i32, i32, i32
  }
  func.func @transform_2(%arg0: i32, %arg1: i32) -> (i32, i32, i32) {
    %c0_i32 = arith.constant 0 : i32
    %c0_i32_0 = arith.constant 0 : i32
    %c0_i32_1 = arith.constant 0 : i32
    return %arg0, %c0_i32, %c0_i32_0 : i32, i32, i32
  }
}

</mosaic_0001>

<llo_original>
// kernel: tpu_custom_call.1
$region0: #{tpu_custom_call.1}
  #allocation0 [shape = 'u32[]', space=smem, size = 0x4, offset = 0x4, fixed_abs, tag = 'smem constant byte address 0x4 - core index']
  #allocation1 [shape = 'u32[72,128]{1,0:T(1,128)}', space=vmem, size = 0x9000, scoped, tag = 'internal scratch']
  %s0 = inlined_call_operand.hbm [shape: bf16[512,128], index: 0, kind: input, shape index: {}]
  %s1 = inlined_call_operand.hbm [shape: f32[2,128,128], index: 1, kind: output, shape index: {0}]
  %s2 = inlined_call_operand.hbm [shape: f32[2,1,128], index: 2, kind: output, shape index: {1}]
  %3 = xla_tuple %s1, %s2
  %s4 = sld [smem:[#allocation0]]
  $region53: #{tpu_custom_call.1} parent=0
    _
  %s6 = ssub.s32 1, %s4
  %s7 = scalar_select 0, %s6, %s4
  $region1: #{tpu_custom_call.1} parent=0
    #allocation2 [shape = 'u8[131072]{0}', space=vmem, size = 0x20000, scoped, tag = 'input window, operand 0']
    #allocation3 [shape = 's32[2]{0}', space=sflag, size = 0x8, scoped, tag = 'scoped memory for tpu_custom_call.1']
    #allocation4 [shape = 's32[2]{0}', space=sflag, size = 0x8, scoped, tag = 'scoped memory for tpu_custom_call.1']
    #allocation5 [shape = 'u8[131072]{0}', space=vmem, size = 0x20000, scoped, tag = 'output window, operand 0']
    #allocation6 [shape = 'u8[1024]{0}', space=vmem, size = 0x400, scoped, tag = 'output window, operand 1']
    #allocation7 [shape = 's32[2]{0}', space=sflag, size = 0x8, scoped, tag = 'scoped memory for tpu_custom_call.1']
    %8 = vsyncpa [#allocation3], 0
    %s9 = scalar_lea.sflag [#allocation3], 1
    %10 = vsyncpa %s9, 0
    %11 = vsyncpa [#allocation4], 0
    %s12 = scalar_lea.sflag [#allocation4], 1
    %13 = vsyncpa %s12, 0
    %14 = vsyncpa [#allocation7], 0
    %s15 = scalar_lea.sflag [#allocation7], 1
    %16 = vsyncpa %s15, 0
    loop: start=0, step=1, limit=4
    $region2: #{tpu_custom_call.1} parent=1 // loop_pre_header
      _
    $region3: #{tpu_custom_call.1} parent=1 // loop_header
      %s18 = sphi 0, %s22
      %p19 = scmp.ge.s32.totalorder %s18, 4
      %s25 = sphi 0, %s37
      %s26 = sphi 0, %s33
      %s27 = sphi 0, %s25
      %s28 = sphi 0, %s26
      %s29 = sphi 0, %s27
      %s30 = sphi 0, %s28
      %s42 = sphi 0, %s44
      %s45 = sphi 0, %s42
      %s46 = sphi 0, %s45
      %s62 = sphi 0, %s46
      %s68 = sphi 0, %s70
      %s71 = sphi 0, %s68
      %s72 = sphi 0, %s71
      %s88 = sphi 0, %s72
      %s94 = sphi 0, %s96
      %s97 = sphi 0, %s94
      %s98 = sphi 0, %s97
      %s114 = sphi 0, %s98
    $region4: #{tpu_custom_call.1} parent=1 // loop_header_branch
      %21 = sbr.rel (%p19) target = $region8
    $region5: #{tpu_custom_call.1} parent=1 // loop_body
      %s23 = ssub.s32 %s18, 1
      %s24 = ssub.s32 %s18, 2
      %s31 = sadd.s32 1, %s26
      %p32 = scmp.ge.s32.totalorder %s31, 1
      %s33 = scalar_select %p32, 0, %s31
      %s34 = sadd.s32 1, %s25
      %s35 = scalar_select %p32, %s34, %s25
      %p36 = scmp.ge.s32.totalorder %s35, 2
      %s37 = scalar_select %p36, 0, %s35
      %s38 = sadd.s32 %s25, %s26
      %s39 = sadd.s32 %s37, %s33
      %s40 = ssub.s32 %s38, %s39
      %p41 = scmp.eq.s32.totalorder %s40, 0
      %s43 = sadd.s32 %s42, 1
      %s44 = scalar_select %p41, %s42, %s43
      %p47 = pneg %p41
      %p48 = scmp.eq.s32.totalorder %s18, 1
      %p49 = por %p47, %p48
      %p50 = scmp.ne.s32.totalorder %s42, %s45
      %p51 = scmp.eq.s32.totalorder %s18, 0
      %p52 = por %p50, %p51
      %p53 = scmp.ne.s32.totalorder %s42, %s45
      %p54 = scmp.eq.s32.totalorder %s23, 1
      %p55 = por %p53, %p54
      %p56 = scmp.ne.s32.totalorder %s45, %s46
      %p57 = scmp.eq.s32.totalorder %s23, 0
      %p58 = por %p56, %p57
      %p59 = scmp.ne.s32.totalorder %s45, %s46
      %p60 = scmp.eq.s32.totalorder %s24, 1
      %p61 = por %p59, %p60
      %p63 = scmp.ne.s32.totalorder %s46, %s62
      %p64 = scmp.eq.s32.totalorder %s24, 0
      %p65 = por %p63, %p64
      %s66 = ssub.s32 %s25, %s37
      %p67 = scmp.eq.s32.totalorder %s66, 0
      %s69 = sadd.s32 %s68, 1
      %s70 = scalar_select %p67, %s68, %s69
      %p73 = pneg %p67
      %p74 = scmp.eq.s32.totalorder %s18, 1
      %p75 = por %p73, %p74
      %p76 = scmp.ne.s32.totalorder %s68, %s71
      %p77 = scmp.eq.s32.totalorder %s18, 0
      %p78 = por %p76, %p77
      %p79 = scmp.ne.s32.totalorder %s68, %s71
      %p80 = scmp.eq.s32.totalorder %s23, 1
      %p81 = por %p79, %p80
      %p82 = scmp.ne.s32.totalorder %s71, %s72
      %p83 = scmp.eq.s32.totalorder %s23, 0
      %p84 = por %p82, %p83
      %p85 = scmp.ne.s32.totalorder %s71, %s72
      %p86 = scmp.eq.s32.totalorder %s24, 1
      %p87 = por %p85, %p86
      %p89 = scmp.ne.s32.totalorder %s72, %s88
      %p90 = scmp.eq.s32.totalorder %s24, 0
      %p91 = por %p89, %p90
      %s92 = ssub.s32 %s25, %s37
      %p93 = scmp.eq.s32.totalorder %s92, 0
      %s95 = sadd.s32 %s94, 1
      %s96 = scalar_select %p93, %s94, %s95
      %p99 = pneg %p93
      %p100 = scmp.eq.s32.totalorder %s18, 1
      %p101 = por %p99, %p100
      %p102 = scmp.ne.s32.totalorder %s94, %s97
      %p103 = scmp.eq.s32.totalorder %s18, 0
      %p104 = por %p102, %p103
      %p105 = scmp.ne.s32.totalorder %s94, %s97
      %p106 = scmp.eq.s32.totalorder %s23, 1
      %p107 = por %p105, %p106
      %p108 = scmp.ne.s32.totalorder %s97, %s98
      %p109 = scmp.eq.s32.totalorder %s23, 0
      %p110 = por %p108, %p109
      %p111 = scmp.ne.s32.totalorder %s97, %s98
      %p112 = scmp.eq.s32.totalorder %s24, 1
      %p113 = por %p111, %p112
      %p115 = scmp.ne.s32.totalorder %s98, %s114
      %p116 = scmp.eq.s32.totalorder %s24, 0
      %p117 = por %p115, %p116
      %p118 = scmp.le.s32.totalorder 1, %s18
      %p119 = scmp.lt.s32.totalorder %s18, 3
      %p120 = pnand %p118, %p119
      %p121 = pneg %p120
      // Predicated region
      $region9: #{tpu_custom_call.1} parent=5 // pred_check
        _
      $region10: #{tpu_custom_call.1} parent=5 // pred_check_branch
        %123 = sbr.rel (%p120) target = $region12
      $region11: #{tpu_custom_call.1} parent=5 // pred_region
        %s124 = ssub.s32 %s18, 1
      $region12: #{tpu_custom_call.1} parent=5 // pred_fallthru
        _
      %p125 = scmp.lt.s32.totalorder %s18, 2
      // Predicated region
      $region13: #{tpu_custom_call.1} parent=5 // pred_check
        %p126 = pneg %p125
      $region14: #{tpu_custom_call.1} parent=5 // pred_check_branch
        %128 = sbr.rel (%p126) target = $region16
      $region15: #{tpu_custom_call.1} parent=5 // pred_region
        // Predicated region
        $region17: #{tpu_custom_call.1} parent=15 // pred_check
          %p129 = pneg %p52
        $region18: #{tpu_custom_call.1} parent=15 // pred_check_branch
          %131 = sbr.rel (%p129) target = $region20
        $region19: #{tpu_custom_call.1} parent=15 // pred_region
          %s132 = sand.u32 %s42, 1
          %s133 = scalar_lea.sflag [#allocation3], %s132
          %s134 = sand.u32 %s42, 1
          %s135 = smul.addr %s134, 128
          %s136 = scalar_lea.vmem [#allocation2], %s135
          %s137 = sadd.s32 %s25, %s26
          %s138 = smul.u32 32, %s137
          %140 = vsyncadd %s133, 0
          %s141 = smul.addr %s138, 4
          %s142 = scalar_lea.hbm %s0, %s141
          %s143 = sshll.u32 %s142, 4
          %s144 = int_to_ptr.hbm [resolvable:$true] %s143
          %s145 = sshll.u32 %s136, 4
          %s146 = int_to_ptr.vmem [resolvable:$true] %s145
          %151 = dma.hbm_to_vmem [thread:$0]  %s144, 2048, %s146, %s133, 64, 64, 4
        $region20: #{tpu_custom_call.1} parent=15 // pred_fallthru
          _
      $region16: #{tpu_custom_call.1} parent=5 // pred_fallthru
        _
      %p152 = scmp.le.s32.totalorder 1, %s18
      %p153 = scmp.lt.s32.totalorder %s18, 3
      %p154 = pnand %p152, %p153
      %p155 = pneg %p154
      // Predicated region
      $region21: #{tpu_custom_call.1} parent=5 // pred_check
        _
      $region22: #{tpu_custom_call.1} parent=5 // pred_check_branch
        %157 = sbr.rel (%p154) target = $region24
      $region23: #{tpu_custom_call.1} parent=5 // pred_region
        %s158 = ssub.s32 %s18, 1
        %s159 = sand.u32 %s45, 1
        %s160 = scalar_lea.sflag [#allocation3], %s159
        %s161 = sand.u32 %s45, 1
        %s162 = smul.addr %s161, 128
        %s163 = scalar_lea.vmem [#allocation2], %s162
        // Predicated region
        $region25: #{tpu_custom_call.1} parent=23 // pred_check
          %p164 = pneg %p58
        $region26: #{tpu_custom_call.1} parent=23 // pred_check_branch
          %166 = sbr.rel (%p164) target = $region28
        $region27: #{tpu_custom_call.1} parent=23 // pred_region
          %168 = dma.done %s160, 2048
        $region28: #{tpu_custom_call.1} parent=23 // pred_fallthru
          _
        %s169 = sand.u32 %s45, 1
        %s170 = scalar_lea.sflag [#allocation3], %s169
        %s171 = sand.u32 %s45, 1
        %s172 = smul.addr %s171, 128
        %s173 = scalar_lea.vmem [#allocation2], %s172
        %p174 = pneg %p58
        %p175 = pneg %p55
        %p176 = pneg %p84
        %p177 = pneg %p81
        %s178 = sand.u32 %s71, 1
        %s179 = scalar_lea.sflag [#allocation4], %s178
        %s180 = sand.u32 %s71, 1
        %s181 = smul.addr %s180, 128
        %s182 = scalar_lea.vmem [#allocation5], %s181
        %p183 = pneg %p110
        %p184 = pneg %p107
        %s185 = sand.u32 %s97, 1
        %s186 = scalar_lea.sflag [#allocation7], %s185
        %s187 = sand.u32 %s97, 1
        %s188 = scalar_lea.vmem [#allocation6], %s187
        %s189 = sadd.s32 %s27, %s28
        %s190 = smul.u32 32, %s189
        %p191 = scmp.eq.s32.totalorder %s28, 0
        // Predicated region
        $region29: #{tpu_custom_call.1} parent=23 // pred_check
          %p192 = pneg %p191
        $region30: #{tpu_custom_call.1} parent=23 // pred_check_branch
          %194 = sbr.rel (%p192) target = $region32
        $region31: #{tpu_custom_call.1} parent=23 // pred_region
          %195 = vst [vmem:[%s182] sm:$0xff] 0.0
          %196 = vst [vmem:[%s182 + $0x8] sm:$0xff] 0.0
          %197 = vst [vmem:[%s182 + $0x10] sm:$0xff] 0.0
          %198 = vst [vmem:[%s182 + $0x18] sm:$0xff] 0.0
          %199 = vst [vmem:[%s182 + $0x20] sm:$0xff] 0.0
          %200 = vst [vmem:[%s182 + $0x28] sm:$0xff] 0.0
          %201 = vst [vmem:[%s182 + $0x30] sm:$0xff] 0.0
          %202 = vst [vmem:[%s182 + $0x38] sm:$0xff] 0.0
          %203 = vst [vmem:[%s182 + $0x40] sm:$0xff] 0.0
          %204 = vst [vmem:[%s182 + $0x48] sm:$0xff] 0.0
          %205 = vst [vmem:[%s182 + $0x50] sm:$0xff] 0.0
          %206 = vst [vmem:[%s182 + $0x58] sm:$0xff] 0.0
          %207 = vst [vmem:[%s182 + $0x60] sm:$0xff] 0.0
          %208 = vst [vmem:[%s182 + $0x68] sm:$0xff] 0.0
          %209 = vst [vmem:[%s182 + $0x70] sm:$0xff] 0.0
          %210 = vst [vmem:[%s182 + $0x78] sm:$0xff] 0.0
          %211 = vst [vmem:[%s188] sm:$0x1] 0.0
        $region32: #{tpu_custom_call.1} parent=23 // pred_fallthru
          _
        %v212 = vld [vmem:[%s163] sm:$0xf]
        %v213 = vld [vmem:[%s163 + $0x4] sm:$0xf]
        %v214 = vld [vmem:[%s163 + $0x8] sm:$0xf]
        %v215 = vld [vmem:[%s163 + $0xc] sm:$0xf]
        %v216 = vld [vmem:[%s163 + $0x10] sm:$0xf]
        %v217 = vld [vmem:[%s163 + $0x14] sm:$0xf]
        %v218 = vld [vmem:[%s163 + $0x18] sm:$0xf]
        %v219 = vld [vmem:[%s163 + $0x1c] sm:$0xf]
        %v220 = vld [vmem:[%s163 + $0x20] sm:$0xf]
        %v221 = vld [vmem:[%s163 + $0x24] sm:$0xf]
        %v222 = vld [vmem:[%s163 + $0x28] sm:$0xf]
        %v223 = vld [vmem:[%s163 + $0x2c] sm:$0xf]
        %v224 = vld [vmem:[%s163 + $0x30] sm:$0xf]
        %v225 = vld [vmem:[%s163 + $0x34] sm:$0xf]
        %v226 = vld [vmem:[%s163 + $0x38] sm:$0xf]
        %v227 = vld [vmem:[%s163 + $0x3c] sm:$0xf]
        %v228 = vld [vmem:[%s163 + $0x40] sm:$0xf]
        %v229 = vld [vmem:[%s163 + $0x44] sm:$0xf]
        %v230 = vld [vmem:[%s163 + $0x48] sm:$0xf]
        %v231 = vld [vmem:[%s163 + $0x4c] sm:$0xf]
        %v232 = vld [vmem:[%s163 + $0x50] sm:$0xf]
        %v233 = vld [vmem:[%s163 + $0x54] sm:$0xf]
        %v234 = vld [vmem:[%s163 + $0x58] sm:$0xf]
        %v235 = vld [vmem:[%s163 + $0x5c] sm:$0xf]
        %v236 = vld [vmem:[%s163 + $0x60] sm:$0xf]
        %v237 = vld [vmem:[%s163 + $0x64] sm:$0xf]
        %v238 = vld [vmem:[%s163 + $0x68] sm:$0xf]
        %v239 = vld [vmem:[%s163 + $0x6c] sm:$0xf]
        %v240 = vld [vmem:[%s163 + $0x70] sm:$0xf]
        %v241 = vld [vmem:[%s163 + $0x74] sm:$0xf]
        %v242 = vld [vmem:[%s163 + $0x78] sm:$0xf]
        %v243 = vld [vmem:[%s163 + $0x7c] sm:$0xf]
        %v244 = vld [vmem:[%s182] sm:$0xff]
        %v245 = vld [vmem:[%s182 + $0x8] sm:$0xff]
        %v246 = vld [vmem:[%s182 + $0x10] sm:$0xff]
        %v247 = vld [vmem:[%s182 + $0x18] sm:$0xff]
        %v248 = vld [vmem:[%s182 + $0x20] sm:$0xff]
        %v249 = vld [vmem:[%s182 + $0x28] sm:$0xff]
        %v250 = vld [vmem:[%s182 + $0x30] sm:$0xff]
        %v251 = vld [vmem:[%s182 + $0x38] sm:$0xff]
        %v252 = vld [vmem:[%s182 + $0x40] sm:$0xff]
        %v253 = vld [vmem:[%s182 + $0x48] sm:$0xff]
        %v254 = vld [vmem:[%s182 + $0x50] sm:$0xff]
        %v255 = vld [vmem:[%s182 + $0x58] sm:$0xff]
        %v256 = vld [vmem:[%s182 + $0x60] sm:$0xff]
        %v257 = vld [vmem:[%s182 + $0x68] sm:$0xff]
        %v258 = vld [vmem:[%s182 + $0x70] sm:$0xff]
        %v259 = vld [vmem:[%s182 + $0x78] sm:$0xff]
        %v292 = vunpack.c.l.b16 %v212
        %v293 = vunpack.c.l.b16 %v213
        %v294 = vunpack.c.l.b16 %v214
        %v295 = vunpack.c.l.b16 %v215
        %v296 = vunpack.c.l.b16 %v216
        %v297 = vunpack.c.l.b16 %v217
        %v298 = vunpack.c.l.b16 %v218
        %v299 = vunpack.c.l.b16 %v219
        %v300 = vunpack.c.l.b16 %v220
        %v301 = vunpack.c.l.b16 %v221
        %v302 = vunpack.c.l.b16 %v222
        %v303 = vunpack.c.l.b16 %v223
        %v304 = vunpack.c.l.b16 %v224
        %v305 = vunpack.c.l.b16 %v225
        %v306 = vunpack.c.l.b16 %v226
        %v307 = vunpack.c.l.b16 %v227
        %v308 = vunpack.c.l.b16 %v228
        %v309 = vunpack.c.l.b16 %v229
        %v310 = vunpack.c.l.b16 %v230
        %v311 = vunpack.c.l.b16 %v231
        %v312 = vunpack.c.l.b16 %v232
        %v313 = vunpack.c.l.b16 %v233
        %v314 = vunpack.c.l.b16 %v234
        %v315 = vunpack.c.l.b16 %v235
        %v316 = vunpack.c.l.b16 %v236
        %v317 = vunpack.c.l.b16 %v237
        %v318 = vunpack.c.l.b16 %v238
        %v319 = vunpack.c.l.b16 %v239
        %v320 = vunpack.c.l.b16 %v240
        %v321 = vunpack.c.l.b16 %v241
        %v322 = vunpack.c.l.b16 %v242
        %v323 = vunpack.c.l.b16 %v243
        %v324 = vpack.c.b16 %v293, %v292
        %v325 = vpack.c.b16 %v295, %v294
        %v326 = vpack.c.b16 %v297, %v296
        %v327 = vpack.c.b16 %v299, %v298
        %v328 = vpack.c.b16 %v301, %v300
        %v329 = vpack.c.b16 %v303, %v302
        %v330 = vpack.c.b16 %v305, %v304
        %v331 = vpack.c.b16 %v307, %v306
        %v332 = vpack.c.b16 %v309, %v308
        %v333 = vpack.c.b16 %v311, %v310
        %v334 = vpack.c.b16 %v313, %v312
        %v335 = vpack.c.b16 %v315, %v314
        %v336 = vpack.c.b16 %v317, %v316
        %v337 = vpack.c.b16 %v319, %v318
        %v338 = vpack.c.b16 %v321, %v320
        %v339 = vpack.c.b16 %v323, %v322
        %356 = vxpose.xlu0.c.b16.start [1/8] %v324, 128
        %357 = vxpose.xlu0.c.b16.cont [2/8] %v325, 128
        %358 = vxpose.xlu0.c.b16.cont [3/8] %v326, 128
        %359 = vxpose.xlu0.c.b16.cont [4/8] %v327, 128
        %360 = vxpose.xlu0.c.b16.cont [5/8] %v328, 128
        %361 = vxpose.xlu0.c.b16.cont [6/8] %v329, 128
        %362 = vxpose.xlu0.c.b16.cont [7/8] %v330, 128
        %363 = vxpose.xlu0.c.b16.end [8/8] %v331, 128
        %v364 = vpop.trf.xlu0
        %v365 = vpop.trf.xlu0
        %v366 = vpop.trf.xlu0
        %v367 = vpop.trf.xlu0
        %v368 = vpop.trf.xlu0
        %v369 = vpop.trf.xlu0
        %v370 = vpop.trf.xlu0
        %v371 = vpop.trf.xlu0
        %372 = vxpose.xlu0.c.b16.start [1/8] %v332, 128
        %373 = vxpose.xlu0.c.b16.cont [2/8] %v333, 128
        %374 = vxpose.xlu0.c.b16.cont [3/8] %v334, 128
        %375 = vxpose.xlu0.c.b16.cont [4/8] %v335, 128
        %376 = vxpose.xlu0.c.b16.cont [5/8] %v336, 128
        %377 = vxpose.xlu0.c.b16.cont [6/8] %v337, 128
        %378 = vxpose.xlu0.c.b16.cont [7/8] %v338, 128
        %379 = vxpose.xlu0.c.b16.end [8/8] %v339, 128
        %v380 = vpop.trf.xlu0
        %v381 = vpop.trf.xlu0
        %v382 = vpop.trf.xlu0
        %v383 = vpop.trf.xlu0
        %v384 = vpop.trf.xlu0
        %v385 = vpop.trf.xlu0
        %v386 = vpop.trf.xlu0
        %v387 = vpop.trf.xlu0
        %388 = vmatpush.bf16.msra.mxu0 %v331
        %389 = vmatpush.bf16.msra.mxu0 %v330
        %390 = vmatpush.bf16.msra.mxu0 %v329
        %391 = vmatpush.bf16.msra.mxu0 %v328
        %392 = vmatpush.bf16.msra.mxu0 %v327
        %393 = vmatpush.bf16.msra.mxu0 %v326
        %394 = vmatpush.bf16.msra.mxu0 %v325
        %395 = vmatpush.bf16.msra.mxu0 %v324
        %396 = vmatmul.bf16.gmra.mxu0 %v364
        %v397 = vpop.f32.mrf.mxu0
        %v398 = vadd.f32 0.0, %v397
        %v399 = vpop.f32.mrf.mxu0
        %v400 = vadd.f32 0.0, %v399
        %401 = vmatmul.bf16.gmra.mxu0 %v365
        %v402 = vpop.f32.mrf.mxu0
        %v403 = vadd.f32 0.0, %v402
        %v404 = vpop.f32.mrf.mxu0
        %v405 = vadd.f32 0.0, %v404
        %406 = vmatmul.bf16.gmra.mxu0 %v366
        %v407 = vpop.f32.mrf.mxu0
        %v408 = vadd.f32 0.0, %v407
        %v409 = vpop.f32.mrf.mxu0
        %v410 = vadd.f32 0.0, %v409
        %411 = vmatmul.bf16.gmra.mxu0 %v367
        %v412 = vpop.f32.mrf.mxu0
        %v413 = vadd.f32 0.0, %v412
        %v414 = vpop.f32.mrf.mxu0
        %v415 = vadd.f32 0.0, %v414
        %416 = vmatmul.bf16.gmra.mxu0 %v368
        %v417 = vpop.f32.mrf.mxu0
        %v418 = vadd.f32 0.0, %v417
        %v419 = vpop.f32.mrf.mxu0
        %v420 = vadd.f32 0.0, %v419
        %421 = vmatmul.bf16.gmra.mxu0 %v369
        %v422 = vpop.f32.mrf.mxu0
        %v423 = vadd.f32 0.0, %v422
        %v424 = vpop.f32.mrf.mxu0
        %v425 = vadd.f32 0.0, %v424
        %426 = vmatmul.bf16.gmra.mxu0 %v370
        %v427 = vpop.f32.mrf.mxu0
        %v428 = vadd.f32 0.0, %v427
        %v429 = vpop.f32.mrf.mxu0
        %v430 = vadd.f32 0.0, %v429
        %431 = vmatmul.bf16.gmra.mxu0 %v371
        %v432 = vpop.f32.mrf.mxu0
        %v433 = vadd.f32 0.0, %v432
        %v434 = vpop.f32.mrf.mxu0
        %v435 = vadd.f32 0.0, %v434
        %436 = vdwg.mxu0
        %437 = vmatpush.bf16.msra.mxu0 %v339
        %438 = vmatpush.bf16.msra.mxu0 %v338
        %439 = vmatpush.bf16.msra.mxu0 %v337
        %440 = vmatpush.bf16.msra.mxu0 %v336
        %441 = vmatpush.bf16.msra.mxu0 %v335
        %442 = vmatpush.bf16.msra.mxu0 %v334
        %443 = vmatpush.bf16.msra.mxu0 %v333
        %444 = vmatpush.bf16.msra.mxu0 %v332
        %445 = vmatmul.bf16.gmra.mxu0 %v380
        %v446 = vpop.f32.mrf.mxu0
        %v447 = vadd.f32 %v398, %v446
        %v448 = vpop.f32.mrf.mxu0
        %v449 = vadd.f32 %v400, %v448
        %450 = vmatmul.bf16.gmra.mxu0 %v381
        %v451 = vpop.f32.mrf.mxu0
        %v452 = vadd.f32 %v403, %v451
        %v453 = vpop.f32.mrf.mxu0
        %v454 = vadd.f32 %v405, %v453
        %455 = vmatmul.bf16.gmra.mxu0 %v382
        %v456 = vpop.f32.mrf.mxu0
        %v457 = vadd.f32 %v408, %v456
        %v458 = vpop.f32.mrf.mxu0
        %v459 = vadd.f32 %v410, %v458
        %460 = vmatmul.bf16.gmra.mxu0 %v383
        %v461 = vpop.f32.mrf.mxu0
        %v462 = vadd.f32 %v413, %v461
        %v463 = vpop.f32.mrf.mxu0
        %v464 = vadd.f32 %v415, %v463
        %465 = vmatmul.bf16.gmra.mxu0 %v384
        %v466 = vpop.f32.mrf.mxu0
        %v467 = vadd.f32 %v418, %v466
        %v468 = vpop.f32.mrf.mxu0
        %v469 = vadd.f32 %v420, %v468
        %470 = vmatmul.bf16.gmra.mxu0 %v385
        %v471 = vpop.f32.mrf.mxu0
        %v472 = vadd.f32 %v423, %v471
        %v473 = vpop.f32.mrf.mxu0
        %v474 = vadd.f32 %v425, %v473
        %475 = vmatmul.bf16.gmra.mxu0 %v386
        %v476 = vpop.f32.mrf.mxu0
        %v477 = vadd.f32 %v428, %v476
        %v478 = vpop.f32.mrf.mxu0
        %v479 = vadd.f32 %v430, %v478
        %480 = vmatmul.bf16.gmra.mxu0 %v387
        %v481 = vpop.f32.mrf.mxu0
        %v482 = vadd.f32 %v433, %v481
        %v483 = vpop.f32.mrf.mxu0
        %v484 = vadd.f32 %v435, %v483
        %485 = vdwg.mxu0
        %v486 = vadd.f32 %v244, %v447
        %v487 = vadd.f32 %v245, %v449
        %v488 = vadd.f32 %v246, %v452
        %v489 = vadd.f32 %v247, %v454
        %v490 = vadd.f32 %v248, %v457
        %v491 = vadd.f32 %v249, %v459
        %v492 = vadd.f32 %v250, %v462
        %v493 = vadd.f32 %v251, %v464
        %v494 = vadd.f32 %v252, %v467
        %v495 = vadd.f32 %v253, %v469
        %v496 = vadd.f32 %v254, %v472
        %v497 = vadd.f32 %v255, %v474
        %v498 = vadd.f32 %v256, %v477
        %v499 = vadd.f32 %v257, %v479
        %v500 = vadd.f32 %v258, %v482
        %v501 = vadd.f32 %v259, %v484
        %502 = vst [vmem:[%s182] sm:$0xff] %v486
        %503 = vst [vmem:[%s182 + $0x8] sm:$0xff] %v487
        %504 = vst [vmem:[%s182 + $0x10] sm:$0xff] %v488
        %505 = vst [vmem:[%s182 + $0x18] sm:$0xff] %v489
        %506 = vst [vmem:[%s182 + $0x20] sm:$0xff] %v490
        %507 = vst [vmem:[%s182 + $0x28] sm:$0xff] %v491
        %508 = vst [vmem:[%s182 + $0x30] sm:$0xff] %v492
        %509 = vst [vmem:[%s182 + $0x38] sm:$0xff] %v493
        %510 = vst [vmem:[%s182 + $0x40] sm:$0xff] %v494
        %511 = vst [vmem:[%s182 + $0x48] sm:$0xff] %v495
        %512 = vst [vmem:[%s182 + $0x50] sm:$0xff] %v496
        %513 = vst [vmem:[%s182 + $0x58] sm:$0xff] %v497
        %514 = vst [vmem:[%s182 + $0x60] sm:$0xff] %v498
        %515 = vst [vmem:[%s182 + $0x68] sm:$0xff] %v499
        %516 = vst [vmem:[%s182 + $0x70] sm:$0xff] %v500
        %517 = vst [vmem:[%s182 + $0x78] sm:$0xff] %v501
        %v518 = vld [vmem:[%s188] sm:$0x1]
        %v519 = vunpack.c.l.bf16 %v212
        %v520 = vunpack.c.l.bf16 %v213
        %v521 = vunpack.c.l.bf16 %v214
        %v522 = vunpack.c.l.bf16 %v215
        %v523 = vunpack.c.l.bf16 %v216
        %v524 = vunpack.c.l.bf16 %v217
        %v525 = vunpack.c.l.bf16 %v218
        %v526 = vunpack.c.l.bf16 %v219
        %v527 = vunpack.c.l.bf16 %v220
        %v528 = vunpack.c.l.bf16 %v221
        %v529 = vunpack.c.l.bf16 %v222
        %v530 = vunpack.c.l.bf16 %v223
        %v531 = vunpack.c.l.bf16 %v224
        %v532 = vunpack.c.l.bf16 %v225
        %v533 = vunpack.c.l.bf16 %v226
        %v534 = vunpack.c.l.bf16 %v227
        %v535 = vunpack.c.l.bf16 %v228
        %v536 = vunpack.c.l.bf16 %v229
        %v537 = vunpack.c.l.bf16 %v230
        %v538 = vunpack.c.l.bf16 %v231
        %v539 = vunpack.c.l.bf16 %v232
        %v540 = vunpack.c.l.bf16 %v233
        %v541 = vunpack.c.l.bf16 %v234
        %v542 = vunpack.c.l.bf16 %v235
        %v543 = vunpack.c.l.bf16 %v236
        %v544 = vunpack.c.l.bf16 %v237
        %v545 = vunpack.c.l.bf16 %v238
        %v546 = vunpack.c.l.bf16 %v239
        %v547 = vunpack.c.l.bf16 %v240
        %v548 = vunpack.c.l.bf16 %v241
        %v549 = vunpack.c.l.bf16 %v242
        %v550 = vunpack.c.l.bf16 %v243
        %v551 = vadd.f32 %v519, %v520
        %v552 = vadd.f32 %v551, %v521
        %v553 = vadd.f32 %v552, %v522
        %v554 = vadd.f32 %v553, %v523
        %v555 = vadd.f32 %v554, %v524
        %v556 = vadd.f32 %v555, %v525
        %v557 = vadd.f32 %v556, %v526
        %v558 = vadd.f32 %v557, %v527
        %v559 = vadd.f32 %v558, %v528
        %v560 = vadd.f32 %v559, %v529
        %v561 = vadd.f32 %v560, %v530
        %v562 = vadd.f32 %v561, %v531
        %v563 = vadd.f32 %v562, %v532
        %v564 = vadd.f32 %v563, %v533
        %v565 = vadd.f32 %v564, %v534
        %v566 = vadd.f32 %v565, %v535
        %v567 = vadd.f32 %v566, %v536
        %v568 = vadd.f32 %v567, %v537
        %v569 = vadd.f32 %v568, %v538
        %v570 = vadd.f32 %v569, %v539
        %v571 = vadd.f32 %v570, %v540
        %v572 = vadd.f32 %v571, %v541
        %v573 = vadd.f32 %v572, %v542
        %v574 = vadd.f32 %v573, %v543
        %v575 = vadd.f32 %v574, %v544
        %v576 = vadd.f32 %v575, %v545
        %v577 = vadd.f32 %v576, %v546
        %v578 = vadd.f32 %v577, %v547
        %v579 = vadd.f32 %v578, %v548
        %v580 = vadd.f32 %v579, %v549
        %v581 = vadd.f32 %v580, %v550
        %v582 = vrot.slane %v581, 4
        %v583 = vadd.f32 %v581, %v582
        %v584 = vrot.slane %v583, 2
        %v585 = vadd.f32 %v583, %v584
        %v586 = vrot.slane %v585, 1
        %v587 = vadd.f32 %v585, %v586
        %v588 = vadd.f32 %v518, %v587
        %589 = vst [vmem:[%s188] sm:$0x1] %v588
        %s590 = sand.u32 %s71, 1
        %s591 = scalar_lea.sflag [#allocation4], %s590
        %s592 = sand.u32 %s71, 1
        %s593 = smul.addr %s592, 128
        %s594 = scalar_lea.vmem [#allocation5], %s593
        %s595 = sand.u32 %s97, 1
        %s596 = scalar_lea.sflag [#allocation7], %s595
        %s597 = sand.u32 %s97, 1
        %s598 = scalar_lea.vmem [#allocation6], %s597
        // Predicated region
        $region33: #{tpu_custom_call.1} parent=23 // pred_check
          %p599 = pneg %p81
        $region34: #{tpu_custom_call.1} parent=23 // pred_check_branch
          %601 = sbr.rel (%p599) target = $region36
        $region35: #{tpu_custom_call.1} parent=23 // pred_region
          %603 = vsyncadd %s591, 0
          %s604 = smul.addr %s27, 16
          %s605 = smul.addr %s604, 8
          %s606 = scalar_lea.hbm %s1, %s605
          %s607 = sshll.u32 %s594, 4
          %s608 = int_to_ptr.vmem [resolvable:$true] %s607
          %s609 = sshll.u32 %s606, 4
          %s610 = int_to_ptr.hbm [resolvable:$true] %s609
          %615 = dma.vmem_to_hbm [thread:$0]  %s608, 2048, %s610, %s591, 128, 128, 8
        $region36: #{tpu_custom_call.1} parent=23 // pred_fallthru
          _
        // Predicated region
        $region37: #{tpu_custom_call.1} parent=23 // pred_check
          %p616 = pneg %p107
        $region38: #{tpu_custom_call.1} parent=23 // pred_check_branch
          %618 = sbr.rel (%p616) target = $region40
        $region39: #{tpu_custom_call.1} parent=23 // pred_region
          %620 = vsyncadd %s596, 0
          %s621 = scalar_lea.hbm %s2, %s27
          %s623 = sshll.u32 %s598, 4
          %s624 = int_to_ptr.vmem [resolvable:$true] %s623
          %s625 = sshll.u32 %s621, 4
          %s626 = int_to_ptr.hbm [resolvable:$true] %s625
          %628 = dma.vmem_to_hbm [thread:$0]  %s624, 16, %s626, %s596
        $region40: #{tpu_custom_call.1} parent=23 // pred_fallthru
          _
      $region24: #{tpu_custom_call.1} parent=5 // pred_fallthru
        _
      %p629 = scmp.le.s32.totalorder 2, %s18
      // Predicated region
      $region41: #{tpu_custom_call.1} parent=5 // pred_check
        %p630 = pneg %p629
      $region42: #{tpu_custom_call.1} parent=5 // pred_check_branch
        %632 = sbr.rel (%p630) target = $region44
      $region43: #{tpu_custom_call.1} parent=5 // pred_region
        %s633 = ssub.s32 %s18, 2
        // Predicated region
        $region45: #{tpu_custom_call.1} parent=43 // pred_check
          %p634 = pneg %p87
        $region46: #{tpu_custom_call.1} parent=43 // pred_check_branch
          %636 = sbr.rel (%p634) target = $region48
        $region47: #{tpu_custom_call.1} parent=43 // pred_region
          %s637 = sand.u32 %s72, 1
          %s638 = scalar_lea.sflag [#allocation4], %s637
          %s639 = sand.u32 %s72, 1
          %s640 = smul.addr %s639, 128
          %s641 = scalar_lea.vmem [#allocation5], %s640
          %643 = dma.done %s638, 2048
        $region48: #{tpu_custom_call.1} parent=43 // pred_fallthru
          _
        // Predicated region
        $region49: #{tpu_custom_call.1} parent=43 // pred_check
          %p644 = pneg %p113
        $region50: #{tpu_custom_call.1} parent=43 // pred_check_branch
          %646 = sbr.rel (%p644) target = $region52
        $region51: #{tpu_custom_call.1} parent=43 // pred_region
          %s647 = sand.u32 %s98, 1
          %s648 = scalar_lea.sflag [#allocation7], %s647
          %s649 = sand.u32 %s98, 1
          %s650 = scalar_lea.vmem [#allocation6], %s649
          %652 = dma.done %s648, 16
        $region52: #{tpu_custom_call.1} parent=43 // pred_fallthru
          _
      $region44: #{tpu_custom_call.1} parent=5 // pred_fallthru
        _
    $region6: #{tpu_custom_call.1} parent=1 // loop_footer
      %s22 = sadd.s32 1, %s18
    $region7: #{tpu_custom_call.1} parent=1 // loop_footer_branch
      %17 = sbr.rel target = $region3
    $region8: #{tpu_custom_call.1} parent=1 // loop_exit
      _
    %653 = vsyncpa [#allocation3], 1
    %s654 = scalar_lea.sflag [#allocation3], 1
    %655 = vsyncpa %s654, 1
    %656 = vsyncpa [#allocation4], 1
    %s657 = scalar_lea.sflag [#allocation4], 1
    %658 = vsyncpa %s657, 1
    %659 = vsyncpa [#allocation7], 1
    %s660 = scalar_lea.sflag [#allocation7], 1
    %661 = vsyncpa %s660, 1

</llo_original>
